<compile_context>
chip_gen: v7x
topology: tpu7x:2x2x1
jax: 0.10.0
libtpu: 0.0.40
codegen_flags: <defaults>
</compile_context>

<pallas_src>
import functools

import jax
import jax.numpy as jnp
from jax.experimental import pallas as pl
from jax.experimental.pallas import tpu as pltpu


def _round_up(x, m):
    return (x + m - 1) // m * m


def _cdiv(a, b):
    return -(-a // b)


def _qnet_duel_kernel(xT_ref, w1_ref, w2_ref, wb1_ref, wb2_ref,
                      b1_ref, b2_ref, bb1_ref, bb2_ref, qT_ref, *, action_dim):
    """Batch-on-lanes forward: every activation is (features, batch_tile)."""
    A = action_dim
    cdt = w1_ref.dtype                      # MXU input dtype (bf16 by default)

    x = xT_ref[...].astype(cdt)             # (S, tb) — batch on the lane axis

    # --- head: Linear -> ReLU -> Linear -> ReLU (f32 accumulation / elementwise) ---
    h = jnp.dot(w1_ref[...], x, preferred_element_type=jnp.float32)        # (M, tb)
    h = jnp.maximum(h + b1_ref[...], 0.0)

    h = jnp.dot(w2_ref[...], h.astype(cdt), preferred_element_type=jnp.float32)
    h = jnp.maximum(h + b2_ref[...], 0.0)                                    # (M, tb)

    # --- fused value|advantage branch, layer 1: rows 0..M-1 = val, M..2M-1 = adv ---
    g = jnp.dot(wb1_ref[...], h.astype(cdt), preferred_element_type=jnp.float32)
    g = jnp.maximum(g + bb1_ref[...], 0.0)                                   # (2M, tb)

    # --- fused branch, layer 2 (block-diagonal): rows 0..A-1 = adv, row A = value,
    #     rows A+1.. are exact-zero padding (weights and biases padded with zeros). ---
    out = jnp.dot(wb2_ref[...], g.astype(cdt), preferred_element_type=jnp.float32)
    out = out + bb2_ref[...]                                                 # (Ap, tb)

    adv = out[:A, :]                          # (A, tb)
    val = out[A:A + 1, :]                     # (1, tb)
    # Aligned full-sublane sum: padded rows are zero, so sum(out) = sum(adv) + val.
    total = jnp.sum(out, axis=0, keepdims=True)
    mean_adv = (total - val) * (1.0 / A)

    # dueling combine: q = val + adv - mean(adv)
    qT_ref[...] = (val + adv - mean_adv).astype(qT_ref.dtype)


def pack_params(params, *, state_dim, action_dim, mid_dim,
                compute_dtype=jnp.bfloat16):
    """Transpose all layers to (out, in), fuse the val/adv branches, pad the final
    fused layer to a sublane multiple with the value head in the LAST row.

    Returns (weights, biases, meta):
      weights: 4 arrays in compute_dtype — (M,S), (M,M), (2M,M), (Ap,2M)
      biases:  4 float32 column vectors  — (M,1), (M,1), (2M,1), (Ap,1)
    """
    (w1, b1, w2, b2, wv1, bv1, wv2, bv2, wa1, ba1, wa2, ba2) = params
    M, A = mid_dim, action_dim
    Ap = _round_up(A + 1, 8)                  # sublane-aligned fused output rows

    w1t = w1.T                                # (M, S)
    w2t = w2.T                                # (M, M)

    # Branch layer 1: stack the two branches along the output rows.
    wb1t = jnp.concatenate([wv1.T, wa1.T], axis=0)          # (2M, M)
    bb1 = jnp.concatenate([bv1, ba1], axis=1).T             # (2M, 1)

    # Branch layer 2: block-diagonal; adv -> rows 0..A-1 (reads g[M:]),
    # value -> row A (reads g[:M]); rows A+1..Ap-1 stay zero.
    wb2t = jnp.zeros((Ap, 2 * M), jnp.float32)
    wb2t = wb2t.at[:A, M:].set(wa2.T)
    wb2t = wb2t.at[A, :M].set(wv2.T[0])
    bb2 = jnp.zeros((Ap, 1), jnp.float32)
    bb2 = bb2.at[:A, 0].set(ba2[0])
    bb2 = bb2.at[A, 0].set(bv2[0, 0])

    weights = tuple(w.astype(compute_dtype) for w in (w1t, w2t, wb1t, wb2t))
    biases = (b1.T, b2.T, bb1, bb2)            # keep biases in f32 (v5e-safe)
    meta = dict(state_dim=state_dim, mid_dim=M, action_dim=A, ap=Ap)
    return weights, biases, meta


def qnet_duel_forward(state, packed, *, batch_tile=1024, dual_core_min_batch=256):
    """state: (B, state_dim) float32 -> q: (B, action_dim) float32."""
    weights, biases, meta = packed
    B, S = state.shape
    assert S == meta["state_dim"]
    A = meta["action_dim"]

    # Even-split batch tiling: n steps of tb rows each; tb is a multiple of 128
    # because the batch lives on the lane axis.  Force >=2 (even) steps for the
    # v7x megacore once the batch is large enough to be worth a second step.
    n = max(1, _cdiv(B, batch_tile))
    if B > dual_core_min_batch:
        n = max(n, 2)
        n += n % 2
    tb = _round_up(_cdiv(B, n), 128)
    Bp = n * tb

    # Batch-on-lanes layout: (S, Bp).  Padding rows compute garbage that is
    # sliced off below (they never feed an in-kernel reduction over the batch).
    xT = jnp.pad(state, ((0, Bp - B), (0, 0))).T

    kernel = functools.partial(_qnet_duel_kernel, action_dim=A)

    in_specs = [pl.BlockSpec((S, tb), lambda i: (0, i))]              # batch tile
    in_specs += [pl.BlockSpec(w.shape, lambda i: (0, 0)) for w in weights]
    in_specs += [pl.BlockSpec(b.shape, lambda i: (0, 0)) for b in biases]

    qT = pl.pallas_call(
        kernel,
        out_shape=jax.ShapeDtypeStruct((A, Bp), jnp.float32),
        grid_spec=pltpu.PrefetchScalarGridSpec(
            num_scalar_prefetch=0,
            grid=(n,),
            in_specs=in_specs,
            out_specs=pl.BlockSpec((A, tb), lambda i: (0, i)),        # lane-dense
        ),
        compiler_params=pltpu.CompilerParams(
            dimension_semantics=("parallel",),     # batch axis -> both TCs on v7x
        ),
    )(xT, *weights, *biases)

    return qT.T[:B]


def init_params(key, state_dim, action_dim, mid_dim):
    """PyTorch-Linear-style init: U(-1/sqrt(fan_in), 1/sqrt(fan_in)).

    Weights stored as (in_features, out_features); biases as (1, out_features).
    """
    dims = [
        (state_dim, mid_dim),   # head linear 1
        (mid_dim, mid_dim),     # head linear 2
        (mid_dim, mid_dim),     # val linear 1
        (mid_dim, 1),           # val linear 2
        (mid_dim, mid_dim),     # adv linear 1
        (mid_dim, action_dim),  # adv linear 2
    ]
    params = []
    for (fan_in, fan_out) in dims:
        key, kw, kb = jax.random.split(key, 3)
        bound = 1.0 / (fan_in ** 0.5)
        w = jax.random.uniform(kw, (fan_in, fan_out), jnp.float32, -bound, bound)
        b = jax.random.uniform(kb, (1, fan_out), jnp.float32, -bound, bound)
        params.extend([w, b])
    return tuple(params)


def qnet_duel_reference(state, params, compute_dtype=jnp.float32):
    """Pure-JAX reference (unfused branches). With compute_dtype=jnp.float32 this is
    exactly the PyTorch forward; with jnp.bfloat16 it mirrors the kernel's MXU casts
    (bf16 matmul inputs, f32 accumulation) for a tight numerical comparison."""
    (w1, b1, w2, b2, wv1, bv1, wv2, bv2, wa1, ba1, wa2, ba2) = params
    c = compute_dtype

    def lin(x, w, b):
        return jnp.dot(x.astype(c), w.astype(c),
                       preferred_element_type=jnp.float32) + b

    h = jnp.maximum(lin(state, w1, b1), 0.0)
    h = jnp.maximum(lin(h, w2, b2), 0.0)
    val = lin(jnp.maximum(lin(h, wv1, bv1), 0.0), wv2, bv2)
    adv = lin(jnp.maximum(lin(h, wa1, ba1), 0.0), wa2, ba2)
    return val + adv - adv.mean(axis=1, keepdims=True)


if __name__ == "__main__":
    state_dim, action_dim, mid_dim = 16, 6, 32

    key = jax.random.PRNGKey(0)
    key, k1, k2 = jax.random.split(key, 3)
    params = init_params(key, state_dim, action_dim, mid_dim)
    packed = pack_params(params, state_dim=state_dim, action_dim=action_dim,
                         mid_dim=mid_dim, compute_dtype=jnp.bfloat16)

    ok = True

    # Small batch (single grid step).
    state_small = jax.random.normal(k1, (2, state_dim), jnp.float32)
    q = jax.block_until_ready(qnet_duel_forward(state_small, packed))
    q_ref = qnet_duel_reference(state_small, params, compute_dtype=jnp.bfloat16)
    ok &= (q.shape == (2, action_dim))
    ok &= bool(jnp.allclose(q, q_ref, atol=1e-3, rtol=1e-3))

    # Mid-size batch: exercises the even-split, >=2-step (dual-TC) tiling path.
    state_mid = jax.random.normal(k2, (300, state_dim), jnp.float32)
    q2 = jax.block_until_ready(qnet_duel_forward(state_mid, packed))
    q2_ref = qnet_duel_reference(state_mid, params, compute_dtype=jnp.bfloat16)
    ok &= (q2.shape == (300, action_dim))
    ok &= bool(jnp.allclose(q2, q2_ref, atol=1e-3, rtol=1e-3))

    assert ok, "mismatch vs reference"
    print("KERNEL_OK")
</pallas_src>

<mosaic_0001>
module attributes {stable_mosaic.version = 11 : i64} {
  func.func @_qnet_duel_kernel(%arg0: i32, %arg1: memref<16x128xf32, #tpu.memory_space<vmem>>, %arg2: memref<32x16xbf16, #tpu.memory_space<vmem>>, %arg3: memref<32x32xbf16, #tpu.memory_space<vmem>>, %arg4: memref<64x32xbf16, #tpu.memory_space<vmem>>, %arg5: memref<8x64xbf16, #tpu.memory_space<vmem>>, %arg6: memref<32x1xf32, #tpu.memory_space<vmem>>, %arg7: memref<32x1xf32, #tpu.memory_space<vmem>>, %arg8: memref<64x1xf32, #tpu.memory_space<vmem>>, %arg9: memref<8x1xf32, #tpu.memory_space<vmem>>, %arg10: memref<6x128xf32, #tpu.memory_space<vmem>>) attributes {dimension_semantics = [#tpu.dimension_semantics<parallel>], iteration_bounds = array<i64: 1>, scalar_prefetch = 0 : i64, scratch_operands = 0 : i64, tpu.core_type = #tpu.core_type<tc>, window_params = [{transform_indices = @transform_0, window_bounds = array<i64: 16, 128>}, {pipeline_mode = #tpu.pipeline_mode<synchronous>, transform_indices = @transform_1, window_bounds = array<i64: 32, 16>}, {pipeline_mode = #tpu.pipeline_mode<synchronous>, transform_indices = @transform_2, window_bounds = array<i64: 32, 32>}, {pipeline_mode = #tpu.pipeline_mode<synchronous>, transform_indices = @transform_3, window_bounds = array<i64: 64, 32>}, {pipeline_mode = #tpu.pipeline_mode<synchronous>, transform_indices = @transform_4, window_bounds = array<i64: 8, 64>}, {pipeline_mode = #tpu.pipeline_mode<synchronous>, transform_indices = @transform_5, window_bounds = array<i64: 32, 1>}, {pipeline_mode = #tpu.pipeline_mode<synchronous>, transform_indices = @transform_6, window_bounds = array<i64: 32, 1>}, {pipeline_mode = #tpu.pipeline_mode<synchronous>, transform_indices = @transform_7, window_bounds = array<i64: 64, 1>}, {pipeline_mode = #tpu.pipeline_mode<synchronous>, transform_indices = @transform_8, window_bounds = array<i64: 8, 1>}, {transform_indices = @transform_9, window_bounds = array<i64: 6, 128>}]} {
    %c0 = arith.constant 0 : index
    %c0_0 = arith.constant 0 : index
    %0 = vector.load %arg1[%c0, %c0_0] : memref<16x128xf32, #tpu.memory_space<vmem>>, vector<16x128xf32>
    %1 = arith.truncf %0 : vector<16x128xf32> to vector<16x128xbf16>
    %c0_1 = arith.constant 0 : index
    %c0_2 = arith.constant 0 : index
    %2 = vector.load %arg2[%c0_1, %c0_2] : memref<32x16xbf16, #tpu.memory_space<vmem>>, vector<32x16xbf16>
    %cst = arith.constant dense<0.000000e+00> : vector<32x128xf32>
    %3 = tpu.matmul %2, %1, %cst {dimension_numbers = #tpu.dot_dimension_numbers<[1], [0], [0], [1], [0, 0, 1, 1], [], []>} : vector<32x16xbf16>, vector<16x128xbf16>, vector<32x128xf32> -> vector<32x128xf32>
    %c0_3 = arith.constant 0 : index
    %c0_4 = arith.constant 0 : index
    %4 = vector.load %arg6[%c0_3, %c0_4] : memref<32x1xf32, #tpu.memory_space<vmem>>, vector<32x1xf32>
    %5 = vector.broadcast %4 : vector<32x1xf32> to vector<32x128xf32>
    %6 = arith.addf %3, %5 : vector<32x128xf32>
    %cst_5 = arith.constant 0.000000e+00 : f32
    %7 = vector.broadcast %cst_5 : f32 to vector<32x128xf32>
    %8 = arith.maximumf %6, %7 : vector<32x128xf32>
    %c0_6 = arith.constant 0 : index
    %c0_7 = arith.constant 0 : index
    %9 = vector.load %arg3[%c0_6, %c0_7] : memref<32x32xbf16, #tpu.memory_space<vmem>>, vector<32x32xbf16>
    %10 = arith.truncf %8 : vector<32x128xf32> to vector<32x128xbf16>
    %cst_8 = arith.constant dense<0.000000e+00> : vector<32x128xf32>
    %11 = tpu.matmul %9, %10, %cst_8 {dimension_numbers = #tpu.dot_dimension_numbers<[1], [0], [0], [1], [0, 0, 1, 1], [], []>} : vector<32x32xbf16>, vector<32x128xbf16>, vector<32x128xf32> -> vector<32x128xf32>
    %c0_9 = arith.constant 0 : index
    %c0_10 = arith.constant 0 : index
    %12 = vector.load %arg7[%c0_9, %c0_10] : memref<32x1xf32, #tpu.memory_space<vmem>>, vector<32x1xf32>
    %13 = vector.broadcast %12 : vector<32x1xf32> to vector<32x128xf32>
    %14 = arith.addf %11, %13 : vector<32x128xf32>
    %cst_11 = arith.constant 0.000000e+00 : f32
    %15 = vector.broadcast %cst_11 : f32 to vector<32x128xf32>
    %16 = arith.maximumf %14, %15 : vector<32x128xf32>
    %c0_12 = arith.constant 0 : index
    %c0_13 = arith.constant 0 : index
    %17 = vector.load %arg4[%c0_12, %c0_13] : memref<64x32xbf16, #tpu.memory_space<vmem>>, vector<64x32xbf16>
    %18 = arith.truncf %16 : vector<32x128xf32> to vector<32x128xbf16>
    %cst_14 = arith.constant dense<0.000000e+00> : vector<64x128xf32>
    %19 = tpu.matmul %17, %18, %cst_14 {dimension_numbers = #tpu.dot_dimension_numbers<[1], [0], [0], [1], [0, 0, 1, 1], [], []>} : vector<64x32xbf16>, vector<32x128xbf16>, vector<64x128xf32> -> vector<64x128xf32>
    %c0_15 = arith.constant 0 : index
    %c0_16 = arith.constant 0 : index
    %20 = vector.load %arg8[%c0_15, %c0_16] : memref<64x1xf32, #tpu.memory_space<vmem>>, vector<64x1xf32>
    %21 = vector.broadcast %20 : vector<64x1xf32> to vector<64x128xf32>
    %22 = arith.addf %19, %21 : vector<64x128xf32>
    %cst_17 = arith.constant 0.000000e+00 : f32
    %23 = vector.broadcast %cst_17 : f32 to vector<64x128xf32>
    %24 = arith.maximumf %22, %23 : vector<64x128xf32>
    %c0_18 = arith.constant 0 : index
    %c0_19 = arith.constant 0 : index
    %25 = vector.load %arg5[%c0_18, %c0_19] : memref<8x64xbf16, #tpu.memory_space<vmem>>, vector<8x64xbf16>
    %26 = arith.truncf %24 : vector<64x128xf32> to vector<64x128xbf16>
    %cst_20 = arith.constant dense<0.000000e+00> : vector<8x128xf32>
    %27 = tpu.matmul %25, %26, %cst_20 {dimension_numbers = #tpu.dot_dimension_numbers<[1], [0], [0], [1], [0, 0, 1, 1], [], []>} : vector<8x64xbf16>, vector<64x128xbf16>, vector<8x128xf32> -> vector<8x128xf32>
    %c0_21 = arith.constant 0 : index
    %c0_22 = arith.constant 0 : index
    %28 = vector.load %arg9[%c0_21, %c0_22] : memref<8x1xf32, #tpu.memory_space<vmem>>, vector<8x1xf32>
    %29 = vector.broadcast %28 : vector<8x1xf32> to vector<8x128xf32>
    %30 = arith.addf %27, %29 : vector<8x128xf32>
    %31 = vector.extract_strided_slice %30 {offsets = [0, 0], sizes = [6, 128], strides = [1, 1]} : vector<8x128xf32> to vector<6x128xf32>
    %32 = vector.extract_strided_slice %30 {offsets = [6, 0], sizes = [1, 128], strides = [1, 1]} : vector<8x128xf32> to vector<1x128xf32>
    %cst_23 = arith.constant dense<0.000000e+00> : vector<128xf32>
    %33 = vector.multi_reduction <add>, %30, %cst_23 [0] : vector<8x128xf32> to vector<128xf32>
    %34 = vector.shape_cast %33 : vector<128xf32> to vector<1x128xf32>
    %35 = arith.subf %34, %32 : vector<1x128xf32>
    %cst_24 = arith.constant 0.166666672 : f32
    %36 = vector.broadcast %cst_24 : f32 to vector<1x128xf32>
    %37 = arith.mulf %35, %36 : vector<1x128xf32>
    %38 = vector.broadcast %32 : vector<1x128xf32> to vector<6x128xf32>
    %39 = arith.addf %38, %31 : vector<6x128xf32>
    %40 = vector.broadcast %37 : vector<1x128xf32> to vector<6x128xf32>
    %41 = arith.subf %39, %40 : vector<6x128xf32>
    %c0_25 = arith.constant 0 : index
    %c0_26 = arith.constant 0 : index
    %42 = vector.load %arg10[%c0_25, %c0_26] : memref<6x128xf32, #tpu.memory_space<vmem>>, vector<6x128xf32>
    tpu.vector_store %arg10[%c0_25, %c0_26], %41 {strides = array<i32>} : memref<6x128xf32, #tpu.memory_space<vmem>>, vector<6x128xf32>,
    return
  }
  func.func @transform_0(%arg0: i32) -> (i32, i32) {
    %c0_i32 = arith.constant 0 : i32
    %c0_i32_0 = arith.constant 0 : i32
    return %c0_i32, %arg0 : i32, i32
  }
  func.func @transform_1(%arg0: i32) -> (i32, i32) {
    %c0_i32 = arith.constant 0 : i32
    %c0_i32_0 = arith.constant 0 : i32
    %c0_i32_1 = arith.constant 0 : i32
    return %c0_i32, %c0_i32_0 : i32, i32
  }
  func.func @transform_2(%arg0: i32) -> (i32, i32) {
    %c0_i32 = arith.constant 0 : i32
    %c0_i32_0 = arith.constant 0 : i32
    %c0_i32_1 = arith.constant 0 : i32
    return %c0_i32, %c0_i32_0 : i32, i32
  }
  func.func @transform_3(%arg0: i32) -> (i32, i32) {
    %c0_i32 = arith.constant 0 : i32
    %c0_i32_0 = arith.constant 0 : i32
    %c0_i32_1 = arith.constant 0 : i32
    return %c0_i32, %c0_i32_0 : i32, i32
  }
  func.func @transform_4(%arg0: i32) -> (i32, i32) {
    %c0_i32 = arith.constant 0 : i32
    %c0_i32_0 = arith.constant 0 : i32
    %c0_i32_1 = arith.constant 0 : i32
    return %c0_i32, %c0_i32_0 : i32, i32
  }
  func.func @transform_5(%arg0: i32) -> (i32, i32) {
    %c0_i32 = arith.constant 0 : i32
    %c0_i32_0 = arith.constant 0 : i32
    %c0_i32_1 = arith.constant 0 : i32
    return %c0_i32, %c0_i32_0 : i32, i32
  }
  func.func @transform_6(%arg0: i32) -> (i32, i32) {
    %c0_i32 = arith.constant 0 : i32
    %c0_i32_0 = arith.constant 0 : i32
    %c0_i32_1 = arith.constant 0 : i32
    return %c0_i32, %c0_i32_0 : i32, i32
  }
  func.func @transform_7(%arg0: i32) -> (i32, i32) {
    %c0_i32 = arith.constant 0 : i32
    %c0_i32_0 = arith.constant 0 : i32
    %c0_i32_1 = arith.constant 0 : i32
    return %c0_i32, %c0_i32_0 : i32, i32
  }
  func.func @transform_8(%arg0: i32) -> (i32, i32) {
    %c0_i32 = arith.constant 0 : i32
    %c0_i32_0 = arith.constant 0 : i32
    %c0_i32_1 = arith.constant 0 : i32
    return %c0_i32, %c0_i32_0 : i32, i32
  }
  func.func @transform_9(%arg0: i32) -> (i32, i32) {
    %c0_i32 = arith.constant 0 : i32
    %c0_i32_0 = arith.constant 0 : i32
    return %c0_i32, %arg0 : i32, i32
  }
}

</mosaic_0001>

<llo_original>
// kernel: tpu_custom_call.1
$region0: #{tpu_custom_call.1}
  #allocation0 [shape = 'u32[]', space=smem, size = 0x4, offset = 0x4, fixed_abs, tag = 'smem constant byte address 0x4 - core index']
  #allocation1 [shape = 'u32[144,128]{1,0:T(1,128)}', space=vmem, size = 0x12000, scoped, tag = 'internal scratch']
  %s0 = inlined_call_operand.vmem [shape: f32[16,128], index: 0, kind: input, shape index: {}]
  %s1 = inlined_call_operand.vmem [shape: bf16[32,16], index: 1, kind: input, shape index: {}]
  %s2 = inlined_call_operand.vmem [shape: bf16[32,32], index: 2, kind: input, shape index: {}]
  %s3 = inlined_call_operand.vmem [shape: bf16[64,32], index: 3, kind: input, shape index: {}]
  %s4 = inlined_call_operand.vmem [shape: bf16[8,64], index: 4, kind: input, shape index: {}]
  %s5 = inlined_call_operand.vmem [shape: f32[32,1], index: 5, kind: input, shape index: {}]
  %s6 = inlined_call_operand.vmem [shape: f32[32,1], index: 6, kind: input, shape index: {}]
  %s7 = inlined_call_operand.vmem [shape: f32[64,1], index: 7, kind: input, shape index: {}]
  %s8 = inlined_call_operand.vmem [shape: f32[8,1], index: 8, kind: input, shape index: {}]
  %s9 = inlined_call_operand.hbm [shape: f32[6,128], index: 9, kind: output, shape index: {}]
  %s10 = sld [smem:[#allocation0]]
  $region46: #{tpu_custom_call.1} parent=0
    _
  %s12 = ssub.s32 1, %s10
  %s13 = scalar_select 0, %s12, %s10
  $region1: #{tpu_custom_call.1} parent=0
    #allocation2 [shape = 'u8[4096]{0}', space=vmem, size = 0x1000, scoped, tag = 'output window, operand 0, single buffered']
    #allocation3 [shape = 's32[1]{0}', space=sflag, size = 0x4, scoped, tag = 'scoped memory for tpu_custom_call.1']
    %14 = vsyncpa [#allocation3], 0
    // Predicated region
    $region2: #{tpu_custom_call.1} parent=1 // pred_check
      _
    $region3: #{tpu_custom_call.1} parent=1 // pred_check_branch
      %16 = sbr.rel (0) target = $region5
    $region4: #{tpu_custom_call.1} parent=1 // pred_region
      _
    $region5: #{tpu_custom_call.1} parent=1 // pred_fallthru
      _
    // Predicated region
    $region6: #{tpu_custom_call.1} parent=1 // pred_check
      _
    $region7: #{tpu_custom_call.1} parent=1 // pred_check_branch
      %18 = sbr.rel (0) target = $region9
    $region8: #{tpu_custom_call.1} parent=1 // pred_region
      _
    $region9: #{tpu_custom_call.1} parent=1 // pred_fallthru
      _
    // Predicated region
    $region10: #{tpu_custom_call.1} parent=1 // pred_check
      _
    $region11: #{tpu_custom_call.1} parent=1 // pred_check_branch
      %20 = sbr.rel (0) target = $region13
    $region12: #{tpu_custom_call.1} parent=1 // pred_region
      _
    $region13: #{tpu_custom_call.1} parent=1 // pred_fallthru
      _
    // Predicated region
    $region14: #{tpu_custom_call.1} parent=1 // pred_check
      _
    $region15: #{tpu_custom_call.1} parent=1 // pred_check_branch
      %22 = sbr.rel (0) target = $region17
    $region16: #{tpu_custom_call.1} parent=1 // pred_region
      _
    $region17: #{tpu_custom_call.1} parent=1 // pred_fallthru
      _
    // Predicated region
    $region18: #{tpu_custom_call.1} parent=1 // pred_check
      _
    $region19: #{tpu_custom_call.1} parent=1 // pred_check_branch
      %24 = sbr.rel (0) target = $region21
    $region20: #{tpu_custom_call.1} parent=1 // pred_region
      _
    $region21: #{tpu_custom_call.1} parent=1 // pred_fallthru
      _
    // Predicated region
    $region22: #{tpu_custom_call.1} parent=1 // pred_check
      _
    $region23: #{tpu_custom_call.1} parent=1 // pred_check_branch
      %26 = sbr.rel (0) target = $region25
    $region24: #{tpu_custom_call.1} parent=1 // pred_region
      _
    $region25: #{tpu_custom_call.1} parent=1 // pred_fallthru
      _
    // Predicated region
    $region26: #{tpu_custom_call.1} parent=1 // pred_check
      _
    $region27: #{tpu_custom_call.1} parent=1 // pred_check_branch
      %28 = sbr.rel (0) target = $region29
    $region28: #{tpu_custom_call.1} parent=1 // pred_region
      _
    $region29: #{tpu_custom_call.1} parent=1 // pred_fallthru
      _
    // Predicated region
    $region30: #{tpu_custom_call.1} parent=1 // pred_check
      _
    $region31: #{tpu_custom_call.1} parent=1 // pred_check_branch
      %30 = sbr.rel (0) target = $region33
    $region32: #{tpu_custom_call.1} parent=1 // pred_region
      _
    $region33: #{tpu_custom_call.1} parent=1 // pred_fallthru
      _
    // Predicated region
    $region34: #{tpu_custom_call.1} parent=1 // pred_check
      _
    $region35: #{tpu_custom_call.1} parent=1 // pred_check_branch
      %32 = sbr.rel (0) target = $region37
    $region36: #{tpu_custom_call.1} parent=1 // pred_region
      _
    $region37: #{tpu_custom_call.1} parent=1 // pred_fallthru
      _
    %v34 = vld [vmem:[%s0] sm:$0xff]
    %v35 = vld [vmem:[%s0 + $0x8] sm:$0xff]
    %v36 = vpack.c.bf16 %v35, %v34
    %v37 = vld [vmem:[%s1] sm:$0xf]
    %v38 = vld [vmem:[%s1 + $0x4] sm:$0xf]
    %v39 = vld [vmem:[%s1 + $0x8] sm:$0xf]
    %v40 = vld [vmem:[%s1 + $0xc] sm:$0xf]
    %v41 = vld [vmem:[%s5] sm:$0xff]
    %v42 = vld [vmem:[%s5 + $0x8] sm:$0xff]
    %v43 = vld [vmem:[%s5 + $0x10] sm:$0xff]
    %v44 = vld [vmem:[%s5 + $0x18] sm:$0xff]
    %46 = vset.pattern.permute.xlu0 0
    %47 = vperm.xlu0 %46, %v41
    %v48 = vpop.permute.xlu0 %47
    %51 = vset.pattern.permute.xlu0 0
    %52 = vperm.xlu0 %51, %v42
    %v53 = vpop.permute.xlu0 %52
    %56 = vset.pattern.permute.xlu0 0
    %57 = vperm.xlu0 %56, %v43
    %v58 = vpop.permute.xlu0 %57
    %61 = vset.pattern.permute.xlu0 0
    %62 = vperm.xlu0 %61, %v44
    %v63 = vpop.permute.xlu0 %62
    %v69 = vunpack.c.l.b16 %v37
    %v70 = vunpack.c.l.b16 %v38
    %v71 = vunpack.c.l.b16 %v39
    %v72 = vunpack.c.l.b16 %v40
    %v73 = vpack.c.b16 %v70, %v69
    %v74 = vpack.c.b16 %v72, %v71
    %vm75 = vcmask 130048
    %v77 = vsel %vm75, %v73, 0
    %v80 = vsel %vm75, %v74, 0
    %82 = vmatprep.subr.bf16.mxu0 0
    %83 = vmatpush1.bf16.msra.mxu0 %v36
    %84 = vmatprep.subr.bf16.mxu0 0
    %85 = vmatpush1.bf16.msra.mxu0 0
    %86 = vmatprep.subr.bf16.mxu0 0
    %87 = vmatpush1.bf16.msra.mxu0 0
    %88 = vmatprep.subr.bf16.mxu0 0
    %89 = vmatpush1.bf16.msra.mxu0 0
    %90 = vmatprep.subr.bf16.mxu0 0
    %91 = vmatpush1.bf16.msra.mxu0 0
    %92 = vmatprep.subr.bf16.mxu0 0
    %93 = vmatpush1.bf16.msra.mxu0 0
    %94 = vmatprep.subr.bf16.mxu0 0
    %95 = vmatpush1.bf16.msra.mxu0 0
    %96 = vmatprep.subr.bf16.mxu0 0
    %97 = vmatpush1.bf16.msra.mxu0 0
    %98 = vmatprep.subr.bf16.mxu0 0
    %99 = vmatpush1.bf16.msra.mxu0 0
    %100 = vmatprep.subr.bf16.mxu0 0
    %101 = vmatpush1.bf16.msra.mxu0 0
    %102 = vmatprep.subr.bf16.mxu0 0
    %103 = vmatpush1.bf16.msra.mxu0 0
    %104 = vmatprep.subr.bf16.mxu0 0
    %105 = vmatpush1.bf16.msra.mxu0 0
    %106 = vmatprep.subr.bf16.mxu0 0
    %107 = vmatpush1.bf16.msra.mxu0 0
    %108 = vmatprep.subr.bf16.mxu0 0
    %109 = vmatpush1.bf16.msra.mxu0 0
    %110 = vmatprep.subr.bf16.mxu0 0
    %111 = vmatpush1.bf16.msra.mxu0 0
    %112 = vmatprep.subr.bf16.mxu0 0
    %113 = vmatpush1.bf16.msra.mxu0 0
    %114 = vmatprep.mubr.bf16.mxu0 0
    %115 = vmatmul.mubr.bf16.gmra.mrb[0].mxu0 %v77
    %v116 = vpop.f32.mrb[0].mxu0
    %v117 = vadd.f32 %v48, %v116
    %v118 = vpop.f32.mrb[0].mxu0
    %v119 = vpop.f32.mrb[0].mxu0
    %v120 = vadd.f32 %v53, %v119
    %v121 = vpop.f32.mrb[0].mxu0
    %122 = vmatprep.mubr.bf16.mxu0 0
    %123 = vmatmul.mubr.bf16.gmra.mrb[0].mxu0 %v80
    %v124 = vpop.f32.mrb[0].mxu0
    %v125 = vadd.f32 %v58, %v124
    %v126 = vpop.f32.mrb[0].mxu0
    %v127 = vpop.f32.mrb[0].mxu0
    %v128 = vadd.f32 %v63, %v127
    %v129 = vpop.f32.mrb[0].mxu0
    %130 = vdwg.mxu0
    %v131 = vmax.f32 %v117, 0.0
    %v132 = vmax.f32 %v120, 0.0
    %v133 = vmax.f32 %v125, 0.0
    %v134 = vmax.f32 %v128, 0.0
    %v135 = vld [vmem:[%s2] sm:$0xf]
    %v136 = vld [vmem:[%s2 + $0x4] sm:$0xf]
    %v137 = vld [vmem:[%s2 + $0x8] sm:$0xf]
    %v138 = vld [vmem:[%s2 + $0xc] sm:$0xf]
    %v139 = vpack.c.bf16 %v132, %v131
    %v140 = vpack.c.bf16 %v134, %v133
    %v141 = vld [vmem:[%s6] sm:$0xff]
    %v142 = vld [vmem:[%s6 + $0x8] sm:$0xff]
    %v143 = vld [vmem:[%s6 + $0x10] sm:$0xff]
    %v144 = vld [vmem:[%s6 + $0x18] sm:$0xff]
    %146 = vset.pattern.permute.xlu0 0
    %147 = vperm.xlu0 %146, %v141
    %v148 = vpop.permute.xlu0 %147
    %151 = vset.pattern.permute.xlu0 0
    %152 = vperm.xlu0 %151, %v142
    %v153 = vpop.permute.xlu0 %152
    %156 = vset.pattern.permute.xlu0 0
    %157 = vperm.xlu0 %156, %v143
    %v158 = vpop.permute.xlu0 %157
    %161 = vset.pattern.permute.xlu0 0
    %162 = vperm.xlu0 %161, %v144
    %v163 = vpop.permute.xlu0 %162
    %v169 = vunpack.c.l.b16 %v135
    %v170 = vunpack.c.l.b16 %v136
    %v171 = vunpack.c.l.b16 %v137
    %v172 = vunpack.c.l.b16 %v138
    %v173 = vpack.c.b16 %v170, %v169
    %v174 = vpack.c.b16 %v172, %v171
    %vm175 = vcmask 261120
    %v177 = vsel %vm175, %v173, 0
    %v180 = vsel %vm175, %v174, 0
    %182 = vmatprep.subr.bf16.mxu0 0
    %183 = vmatpush1.bf16.msra.mxu0 %v139
    %184 = vmatprep.subr.bf16.mxu0 0
    %185 = vmatpush1.bf16.msra.mxu0 %v140
    %186 = vmatprep.subr.bf16.mxu0 0
    %187 = vmatpush1.bf16.msra.mxu0 0
    %188 = vmatprep.subr.bf16.mxu0 0
    %189 = vmatpush1.bf16.msra.mxu0 0
    %190 = vmatprep.subr.bf16.mxu0 0
    %191 = vmatpush1.bf16.msra.mxu0 0
    %192 = vmatprep.subr.bf16.mxu0 0
    %193 = vmatpush1.bf16.msra.mxu0 0
    %194 = vmatprep.subr.bf16.mxu0 0
    %195 = vmatpush1.bf16.msra.mxu0 0
    %196 = vmatprep.subr.bf16.mxu0 0
    %197 = vmatpush1.bf16.msra.mxu0 0
    %198 = vmatprep.subr.bf16.mxu0 0
    %199 = vmatpush1.bf16.msra.mxu0 0
    %200 = vmatprep.subr.bf16.mxu0 0
    %201 = vmatpush1.bf16.msra.mxu0 0
    %202 = vmatprep.subr.bf16.mxu0 0
    %203 = vmatpush1.bf16.msra.mxu0 0
    %204 = vmatprep.subr.bf16.mxu0 0
    %205 = vmatpush1.bf16.msra.mxu0 0
    %206 = vmatprep.subr.bf16.mxu0 0
    %207 = vmatpush1.bf16.msra.mxu0 0
    %208 = vmatprep.subr.bf16.mxu0 0
    %209 = vmatpush1.bf16.msra.mxu0 0
    %210 = vmatprep.subr.bf16.mxu0 0
    %211 = vmatpush1.bf16.msra.mxu0 0
    %212 = vmatprep.subr.bf16.mxu0 0
    %213 = vmatpush1.bf16.msra.mxu0 0
    %214 = vmatprep.mubr.bf16.mxu0 0
    %215 = vmatmul.mubr.bf16.gmra.mrb[0].mxu0 %v177
    %v216 = vpop.f32.mrb[0].mxu0
    %v217 = vadd.f32 %v148, %v216
    %v218 = vpop.f32.mrb[0].mxu0
    %v219 = vpop.f32.mrb[0].mxu0
    %v220 = vadd.f32 %v153, %v219
    %v221 = vpop.f32.mrb[0].mxu0
    %222 = vmatprep.mubr.bf16.mxu0 0
    %223 = vmatmul.mubr.bf16.gmra.mrb[0].mxu0 %v180
    %v224 = vpop.f32.mrb[0].mxu0
    %v225 = vadd.f32 %v158, %v224
    %v226 = vpop.f32.mrb[0].mxu0
    %v227 = vpop.f32.mrb[0].mxu0
    %v228 = vadd.f32 %v163, %v227
    %v229 = vpop.f32.mrb[0].mxu0
    %230 = vdwg.mxu0
    %v231 = vmax.f32 %v217, 0.0
    %v232 = vmax.f32 %v220, 0.0
    %v233 = vmax.f32 %v225, 0.0
    %v234 = vmax.f32 %v228, 0.0
    %v235 = vld [vmem:[%s3] sm:$0xf]
    %v236 = vld [vmem:[%s3 + $0x4] sm:$0xf]
    %v237 = vld [vmem:[%s3 + $0x8] sm:$0xf]
    %v238 = vld [vmem:[%s3 + $0xc] sm:$0xf]
    %v239 = vld [vmem:[%s3 + $0x10] sm:$0xf]
    %v240 = vld [vmem:[%s3 + $0x14] sm:$0xf]
    %v241 = vld [vmem:[%s3 + $0x18] sm:$0xf]
    %v242 = vld [vmem:[%s3 + $0x1c] sm:$0xf]
    %v243 = vpack.c.bf16 %v232, %v231
    %v244 = vpack.c.bf16 %v234, %v233
    %v245 = vld [vmem:[%s7] sm:$0xff]
    %v246 = vld [vmem:[%s7 + $0x8] sm:$0xff]
    %v247 = vld [vmem:[%s7 + $0x10] sm:$0xff]
    %v248 = vld [vmem:[%s7 + $0x18] sm:$0xff]
    %v249 = vld [vmem:[%s7 + $0x20] sm:$0xff]
    %v250 = vld [vmem:[%s7 + $0x28] sm:$0xff]
    %v251 = vld [vmem:[%s7 + $0x30] sm:$0xff]
    %v252 = vld [vmem:[%s7 + $0x38] sm:$0xff]
    %254 = vset.pattern.permute.xlu0 0
    %255 = vperm.xlu0 %254, %v245
    %v256 = vpop.permute.xlu0 %255
    %259 = vset.pattern.permute.xlu0 0
    %260 = vperm.xlu0 %259, %v246
    %v261 = vpop.permute.xlu0 %260
    %264 = vset.pattern.permute.xlu0 0
    %265 = vperm.xlu0 %264, %v247
    %v266 = vpop.permute.xlu0 %265
    %269 = vset.pattern.permute.xlu0 0
    %270 = vperm.xlu0 %269, %v248
    %v271 = vpop.permute.xlu0 %270
    %274 = vset.pattern.permute.xlu0 0
    %275 = vperm.xlu0 %274, %v249
    %v276 = vpop.permute.xlu0 %275
    %279 = vset.pattern.permute.xlu0 0
    %280 = vperm.xlu0 %279, %v250
    %v281 = vpop.permute.xlu0 %280
    %284 = vset.pattern.permute.xlu0 0
    %285 = vperm.xlu0 %284, %v251
    %v286 = vpop.permute.xlu0 %285
    %289 = vset.pattern.permute.xlu0 0
    %290 = vperm.xlu0 %289, %v252
    %v291 = vpop.permute.xlu0 %290
    %v301 = vunpack.c.l.b16 %v235
    %v302 = vunpack.c.l.b16 %v236
    %v303 = vunpack.c.l.b16 %v237
    %v304 = vunpack.c.l.b16 %v238
    %v305 = vunpack.c.l.b16 %v239
    %v306 = vunpack.c.l.b16 %v240
    %v307 = vunpack.c.l.b16 %v241
    %v308 = vunpack.c.l.b16 %v242
    %v309 = vpack.c.b16 %v302, %v301
    %v310 = vpack.c.b16 %v304, %v303
    %v311 = vpack.c.b16 %v306, %v305
    %v312 = vpack.c.b16 %v308, %v307
    %v314 = vsel %vm175, %v309, 0
    %v317 = vsel %vm175, %v310, 0
    %v320 = vsel %vm175, %v311, 0
    %v323 = vsel %vm175, %v312, 0
    %325 = vmatprep.subr.bf16.mxu0 0
    %326 = vmatpush1.bf16.msra.mxu0 %v243
    %327 = vmatprep.subr.bf16.mxu0 0
    %328 = vmatpush1.bf16.msra.mxu0 %v244
    %329 = vmatprep.subr.bf16.mxu0 0
    %330 = vmatpush1.bf16.msra.mxu0 0
    %331 = vmatprep.subr.bf16.mxu0 0
    %332 = vmatpush1.bf16.msra.mxu0 0
    %333 = vmatprep.subr.bf16.mxu0 0
    %334 = vmatpush1.bf16.msra.mxu0 0
    %335 = vmatprep.subr.bf16.mxu0 0
    %336 = vmatpush1.bf16.msra.mxu0 0
    %337 = vmatprep.subr.bf16.mxu0 0
    %338 = vmatpush1.bf16.msra.mxu0 0
    %339 = vmatprep.subr.bf16.mxu0 0
    %340 = vmatpush1.bf16.msra.mxu0 0
    %341 = vmatprep.subr.bf16.mxu0 0
    %342 = vmatpush1.bf16.msra.mxu0 0
    %343 = vmatprep.subr.bf16.mxu0 0
    %344 = vmatpush1.bf16.msra.mxu0 0
    %345 = vmatprep.subr.bf16.mxu0 0
    %346 = vmatpush1.bf16.msra.mxu0 0
    %347 = vmatprep.subr.bf16.mxu0 0
    %348 = vmatpush1.bf16.msra.mxu0 0
    %349 = vmatprep.subr.bf16.mxu0 0
    %350 = vmatpush1.bf16.msra.mxu0 0
    %351 = vmatprep.subr.bf16.mxu0 0
    %352 = vmatpush1.bf16.msra.mxu0 0
    %353 = vmatprep.subr.bf16.mxu0 0
    %354 = vmatpush1.bf16.msra.mxu0 0
    %355 = vmatprep.subr.bf16.mxu0 0
    %356 = vmatpush1.bf16.msra.mxu0 0
    %357 = vmatprep.mubr.bf16.mxu0 0
    %358 = vmatmul.mubr.bf16.gmra.mrb[0].mxu0 %v314
    %v359 = vpop.f32.mrb[0].mxu0
    %v360 = vadd.f32 %v256, %v359
    %v361 = vpop.f32.mrb[0].mxu0
    %v362 = vpop.f32.mrb[0].mxu0
    %v363 = vadd.f32 %v261, %v362
    %v364 = vpop.f32.mrb[0].mxu0
    %365 = vmatprep.mubr.bf16.mxu0 0
    %366 = vmatmul.mubr.bf16.gmra.mrb[0].mxu0 %v317
    %v367 = vpop.f32.mrb[0].mxu0
    %v368 = vadd.f32 %v266, %v367
    %v369 = vpop.f32.mrb[0].mxu0
    %v370 = vpop.f32.mrb[0].mxu0
    %v371 = vadd.f32 %v271, %v370
    %v372 = vpop.f32.mrb[0].mxu0
    %373 = vmatprep.mubr.bf16.mxu0 0
    %374 = vmatmul.mubr.bf16.gmra.mrb[0].mxu0 %v320
    %v375 = vpop.f32.mrb[0].mxu0
    %v376 = vadd.f32 %v276, %v375
    %v377 = vpop.f32.mrb[0].mxu0
    %v378 = vpop.f32.mrb[0].mxu0
    %v379 = vadd.f32 %v281, %v378
    %v380 = vpop.f32.mrb[0].mxu0
    %381 = vmatprep.mubr.bf16.mxu0 0
    %382 = vmatmul.mubr.bf16.gmra.mrb[0].mxu0 %v323
    %v383 = vpop.f32.mrb[0].mxu0
    %v384 = vadd.f32 %v286, %v383
    %v385 = vpop.f32.mrb[0].mxu0
    %v386 = vpop.f32.mrb[0].mxu0
    %v387 = vadd.f32 %v291, %v386
    %v388 = vpop.f32.mrb[0].mxu0
    %389 = vdwg.mxu0
    %v390 = vmax.f32 %v360, 0.0
    %v391 = vmax.f32 %v363, 0.0
    %v392 = vmax.f32 %v368, 0.0
    %v393 = vmax.f32 %v371, 0.0
    %v394 = vmax.f32 %v376, 0.0
    %v395 = vmax.f32 %v379, 0.0
    %v396 = vmax.f32 %v384, 0.0
    %v397 = vmax.f32 %v387, 0.0
    %v398 = vld [vmem:[%s4] sm:$0xf]
    %v399 = vpack.c.bf16 %v391, %v390
    %v400 = vpack.c.bf16 %v393, %v392
    %v401 = vpack.c.bf16 %v395, %v394
    %v402 = vpack.c.bf16 %v397, %v396
    %v403 = vld [vmem:[%s8] sm:$0xff]
    %405 = vset.pattern.permute.xlu0 0
    %406 = vperm.xlu0 %405, %v403
    %v407 = vpop.permute.xlu0 %406
    %vm409 = vcmask 523264
    %v411 = vsel %vm409, %v398, 0
    %413 = vmatprep.subr.bf16.mxu0 0
    %414 = vmatpush1.bf16.msra.mxu0 %v399
    %415 = vmatprep.subr.bf16.mxu0 0
    %416 = vmatpush1.bf16.msra.mxu0 %v400
    %417 = vmatprep.subr.bf16.mxu0 0
    %418 = vmatpush1.bf16.msra.mxu0 %v401
    %419 = vmatprep.subr.bf16.mxu0 0
    %420 = vmatpush1.bf16.msra.mxu0 %v402
    %421 = vmatprep.subr.bf16.mxu0 0
    %422 = vmatpush1.bf16.msra.mxu0 0
    %423 = vmatprep.subr.bf16.mxu0 0
    %424 = vmatpush1.bf16.msra.mxu0 0
    %425 = vmatprep.subr.bf16.mxu0 0
    %426 = vmatpush1.bf16.msra.mxu0 0
    %427 = vmatprep.subr.bf16.mxu0 0
    %428 = vmatpush1.bf16.msra.mxu0 0
    %429 = vmatprep.subr.bf16.mxu0 0
    %430 = vmatpush1.bf16.msra.mxu0 0
    %431 = vmatprep.subr.bf16.mxu0 0
    %432 = vmatpush1.bf16.msra.mxu0 0
    %433 = vmatprep.subr.bf16.mxu0 0
    %434 = vmatpush1.bf16.msra.mxu0 0
    %435 = vmatprep.subr.bf16.mxu0 0
    %436 = vmatpush1.bf16.msra.mxu0 0
    %437 = vmatprep.subr.bf16.mxu0 0
    %438 = vmatpush1.bf16.msra.mxu0 0
    %439 = vmatprep.subr.bf16.mxu0 0
    %440 = vmatpush1.bf16.msra.mxu0 0
    %441 = vmatprep.subr.bf16.mxu0 0
    %442 = vmatpush1.bf16.msra.mxu0 0
    %443 = vmatprep.subr.bf16.mxu0 0
    %444 = vmatpush1.bf16.msra.mxu0 0
    %445 = vmatprep.mubr.bf16.mxu0 0
    %446 = vmatmul.mubr.bf16.gmra.mrb[0].mxu0 %v411
    %v447 = vpop.f32.mrb[0].mxu0
    %v448 = vadd.f32 %v407, %v447
    %v449 = vpop.f32.mrb[0].mxu0
    %v450 = vpop.f32.mrb[0].mxu0
    %v451 = vpop.f32.mrb[0].mxu0
    %452 = vdwg.mxu0
    %v453 = vrot.slane %v448, 4
    %v454 = vadd.f32 %v448, %v453
    %v455 = vrot.slane %v454, 2
    %v456 = vadd.f32 %v454, %v455
    %v457 = vrot.slane %v456, 1
    %v458 = vadd.f32 %v456, %v457
    %v459 = vsub.f32 %v458, %v448
    %v460 = vmul.f32 %v459, 0.16666667
    %v461 = vlaneseq
    %v462 = vshrl.u32 %v461, 7
    %v463 = vsub.s32 6, %v462
    %v464 = vrot.slane %v448, %v463
    %v465 = vadd.f32 %v464, %v448
    %v466 = vlaneseq
    %v467 = vshrl.u32 %v466, 7
    %v468 = vsub.s32 6, %v467
    %v469 = vrot.slane %v460, %v468
    %v470 = vsub.f32 %v465, %v469
    %471 = vst [vmem:[#allocation2] sm:$0x3f] %v470
    // Predicated region
    $region38: #{tpu_custom_call.1} parent=1 // pred_check
      _
    $region39: #{tpu_custom_call.1} parent=1 // pred_check_branch
      %473 = sbr.rel (0) target = $region41
    $region40: #{tpu_custom_call.1} parent=1 // pred_region
      %s475 = ssub.s32 128, 128
      %476 = vsyncadd [#allocation3], %s475
      %s478 = sshll.u32 [#allocation2], 4
      %s479 = int_to_ptr.vmem [resolvable:$true] %s478
      %481 = dma.vmem_to_hbm [thread:$0]  %s479, 128, %s9, [#allocation3]
    $region41: #{tpu_custom_call.1} parent=1 // pred_fallthru
      _
    // Predicated region
    $region42: #{tpu_custom_call.1} parent=1 // pred_check
      _
    $region43: #{tpu_custom_call.1} parent=1 // pred_check_branch
      %483 = sbr.rel (0) target = $region45
    $region44: #{tpu_custom_call.1} parent=1 // pred_region
      %484 = dma.done [#allocation3], 128
    $region45: #{tpu_custom_call.1} parent=1 // pred_fallthru
      _
    %485 = vsyncpa [#allocation3], 1

</llo_original>
